<compile_context>
chip_gen: v7x
topology: tpu7x:2x2x1
jax: 0.10.0
libtpu: 0.0.40
codegen_flags: <defaults>
</compile_context>

<pallas_src>
import jax
import jax.numpy as jnp
from jax.experimental import pallas as pl
from jax.experimental.pallas import tpu as pltpu


def _round_up(n, m):
    return ((n + m - 1) // m) * m


def flexible_model_kernel(x_ref, w1t_ref, w_slab_ref, b_slab_ref, o_ref):
    """One batch tile.  Activations are (features, TILE_B): batch on the 128-lane
    axis so all elementwise work and the output store are lane-dense."""
    x = x_ref[...]                      # (3, TB)   input features on sublanes
    b = b_slab_ref[...]                 # (32, 6)   per-layer bias columns

    # Linear(3 -> 32) + ReLU : (32,3) @ (3,TB) + (32,1)
    h = jnp.dot(w1t_ref[...], x, preferred_element_type=jnp.float32) + b[:, 0:1]
    h = jnp.maximum(h, 0.0)

    # Linear(32->32)+ReLU, then three [reshape(16,2) -> Conv1d(16->32,k=2) -> ReLU]
    # stages; each conv (L_out == 1) is a dense (32,32) matmul over the (c_in,k)
    # flattening, so all four stages share the same weight-slab layout.
    for layer in range(4):
        w = w_slab_ref[layer]           # (32, 32), static index -> no copies
        h = jnp.dot(w, h, preferred_element_type=jnp.float32) + b[:, layer + 1:layer + 2]
        h = jnp.maximum(h, 0.0)

    # flatten -> Linear(32 -> 1) + Sigmoid, emitted as a lane-dense (1, TB) row.
    w3 = w_slab_ref[4][0:1, :]          # (1, 32)
    z = jnp.dot(w3, h, preferred_element_type=jnp.float32) + b[0:1, 5:6]
    o_ref[...] = jax.nn.sigmoid(z)


def flexible_model_forward(x, params, *, tile_b=4096):
    """x: (B, 3) f32 -> (B, 1) f32."""
    B, F = x.shape
    assert F == 3

    w1, b1, w2, b2, wc1, bc1, wc2, bc2, wc3, bc3, w3, b3 = params

    # --- pack parameters into 3 resident VMEM inputs -------------------------
    w1t = w1.T                                              # (32, 3)
    w3t_pad = jnp.zeros((32, 32), jnp.float32).at[0].set(w3[:, 0])
    w_slab = jnp.stack([w2.T,                               # Linear2
                        wc1.reshape(32, 32),                # Conv1d #1 (c_out, c_in*k)
                        wc2.reshape(32, 32),                # Conv1d #2
                        wc3.reshape(32, 32),                # Conv1d #3
                        w3t_pad])                           # Linear3 (row 0 only)
    b_slab = jnp.stack([b1, b2, bc1, bc2, bc3,
                        jnp.zeros((32,), jnp.float32).at[0].set(b3[0])],
                       axis=1)                              # (32, 6)

    # --- batch tiling / padding ----------------------------------------------
    tile_b = min(tile_b, _round_up(max(B, 1), 128))         # lane-aligned tile
    B_pad = _round_up(B, tile_b)
    grid = (B_pad // tile_b,)

    x_pad = jnp.zeros((B_pad, F), jnp.float32).at[:B].set(x)
    x_t = x_pad.T                                           # (3, B_pad), batch on lanes

    out_t = pl.pallas_call(
        flexible_model_kernel,
        out_shape=jax.ShapeDtypeStruct((1, B_pad), jnp.float32),
        grid=grid,
        in_specs=[
            pl.BlockSpec((3, tile_b), lambda i: (0, i)),        # activations: tiled
            pl.BlockSpec((32, 3), lambda i: (0, 0)),            # params: resident
            pl.BlockSpec((5, 32, 32), lambda i: (0, 0, 0)),
            pl.BlockSpec((32, 6), lambda i: (0, 0)),
        ],
        out_specs=pl.BlockSpec((1, tile_b), lambda i: (0, i)),
        compiler_params=pltpu.CompilerParams(
            dimension_semantics=("parallel",)),                 # megacore on v7x
    )(x_t, w1t, w_slab, b_slab)

    return out_t[0, :B].reshape(B, 1)


def init_params(key):
    """Deterministic PyTorch-style (Kaiming-uniform-ish) init, natural layouts."""
    def linear(k, fan_in, fan_out):
        kw, kb = jax.random.split(k)
        bound = 1.0 / jnp.sqrt(jnp.float32(fan_in))
        w = jax.random.uniform(kw, (fan_in, fan_out), jnp.float32, -bound, bound)
        b = jax.random.uniform(kb, (fan_out,), jnp.float32, -bound, bound)
        return w, b

    def conv1d(k, c_in=16, c_out=32, ksize=2):
        kw, kb = jax.random.split(k)
        fan_in = c_in * ksize
        bound = 1.0 / jnp.sqrt(jnp.float32(fan_in))
        w = jax.random.uniform(kw, (c_out, c_in, ksize), jnp.float32, -bound, bound)
        b = jax.random.uniform(kb, (c_out,), jnp.float32, -bound, bound)
        return w, b

    keys = jax.random.split(key, 6)
    w1, b1 = linear(keys[0], 3, 32)
    w2, b2 = linear(keys[1], 32, 32)
    wc1, bc1 = conv1d(keys[2])
    wc2, bc2 = conv1d(keys[3])
    wc3, bc3 = conv1d(keys[4])
    w3, b3 = linear(keys[5], 32, 1)
    return (w1, b1, w2, b2, wc1, bc1, wc2, bc2, wc3, bc3, w3, b3)


def reference_forward(x, params):
    """Pure-JAX reference mirroring the PyTorch forward (conv done explicitly)."""
    w1, b1, w2, b2, wc1, bc1, wc2, bc2, wc3, bc3, w3, b3 = params
    h = jax.nn.relu(x @ w1 + b1)
    h = jax.nn.relu(h @ w2 + b2)
    for wc, bc in ((wc1, bc1), (wc2, bc2), (wc3, bc3)):
        xr = h.reshape(-1, 16, 2)                       # reshape layer: view(-1, 16, 2)
        h = jnp.einsum('bck,ock->bo', xr, wc) + bc      # Conv1d with L_out == 1
        h = jax.nn.relu(h)                              # (B, 32) == flattened (B, 32, 1)
    return jax.nn.sigmoid(h @ w3 + b3)


if __name__ == "__main__":
    key = jax.random.PRNGKey(0)
    k_params, k_x, k_x2 = jax.random.split(key, 3)
    params = init_params(k_params)

    # Small smoke test (B=2, as implied by the module input_shape [3]).
    B = 2
    x = jax.random.normal(k_x, (B, 3), dtype=jnp.float32)
    out = flexible_model_forward(x, params)
    out = jax.block_until_ready(out)
    ref = reference_forward(x, params)
    assert out.shape == (B, 1)
    assert jnp.allclose(out, ref, atol=1e-5, rtol=1e-5), (out, ref)

    # Larger, non-multiple-of-tile batch to exercise the grid + padding path.
    B2 = 1000
    x2 = jax.random.normal(k_x2, (B2, 3), dtype=jnp.float32)
    out2 = jax.block_until_ready(flexible_model_forward(x2, params, tile_b=256))
    ref2 = reference_forward(x2, params)
    assert out2.shape == (B2, 1)
    assert jnp.allclose(out2, ref2, atol=1e-5, rtol=1e-5)

    print("KERNEL_OK")
</pallas_src>

<mosaic_0001>
module attributes {stable_mosaic.version = 11 : i64} {
  func.func @flexible_model_kernel(%arg0: i32, %arg1: memref<3x128xf32, #tpu.memory_space<vmem>>, %arg2: memref<32x3xf32, #tpu.memory_space<vmem>>, %arg3: memref<5x32x32xf32, #tpu.memory_space<vmem>>, %arg4: memref<32x6xf32, #tpu.memory_space<vmem>>, %arg5: memref<1x128xf32, #tpu.memory_space<vmem>>) attributes {dimension_semantics = [#tpu.dimension_semantics<parallel>], iteration_bounds = array<i64: 1>, scalar_prefetch = 0 : i64, scratch_operands = 0 : i64, tpu.core_type = #tpu.core_type<tc>, window_params = [{transform_indices = @transform_0, window_bounds = array<i64: 3, 128>}, {pipeline_mode = #tpu.pipeline_mode<synchronous>, transform_indices = @transform_1, window_bounds = array<i64: 32, 3>}, {pipeline_mode = #tpu.pipeline_mode<synchronous>, transform_indices = @transform_2, window_bounds = array<i64: 5, 32, 32>}, {pipeline_mode = #tpu.pipeline_mode<synchronous>, transform_indices = @transform_3, window_bounds = array<i64: 32, 6>}, {transform_indices = @transform_4, window_bounds = array<i64: 1, 128>}]} {
    %c0 = arith.constant 0 : index
    %c0_0 = arith.constant 0 : index
    %0 = vector.load %arg1[%c0, %c0_0] : memref<3x128xf32, #tpu.memory_space<vmem>>, vector<3x128xf32>
    %c0_1 = arith.constant 0 : index
    %c0_2 = arith.constant 0 : index
    %1 = vector.load %arg4[%c0_1, %c0_2] : memref<32x6xf32, #tpu.memory_space<vmem>>, vector<32x6xf32>
    %c0_3 = arith.constant 0 : index
    %c0_4 = arith.constant 0 : index
    %2 = vector.load %arg2[%c0_3, %c0_4] : memref<32x3xf32, #tpu.memory_space<vmem>>, vector<32x3xf32>
    %cst = arith.constant dense<0.000000e+00> : vector<32x128xf32>
    %3 = tpu.matmul %2, %0, %cst {dimension_numbers = #tpu.dot_dimension_numbers<[1], [0], [0], [1], [0, 0, 1, 1], [], []>} : vector<32x3xf32>, vector<3x128xf32>, vector<32x128xf32> -> vector<32x128xf32>
    %4 = vector.extract_strided_slice %1 {offsets = [0, 0], sizes = [32, 1], strides = [1, 1]} : vector<32x6xf32> to vector<32x1xf32>
    %5 = vector.broadcast %4 : vector<32x1xf32> to vector<32x128xf32>
    %6 = arith.addf %3, %5 : vector<32x128xf32>
    %cst_5 = arith.constant 0.000000e+00 : f32
    %7 = vector.broadcast %cst_5 : f32 to vector<32x128xf32>
    %8 = arith.maximumf %6, %7 : vector<32x128xf32>
    %c0_6 = arith.constant 0 : index
    %c0_7 = arith.constant 0 : index
    %c0_8 = arith.constant 0 : index
    %9 = vector.load %arg3[%c0_6, %c0_7, %c0_8] : memref<5x32x32xf32, #tpu.memory_space<vmem>>, vector<1x32x32xf32>
    %10 = vector.shape_cast %9 : vector<1x32x32xf32> to vector<32x32xf32>
    %cst_9 = arith.constant dense<0.000000e+00> : vector<32x128xf32>
    %11 = tpu.matmul %10, %8, %cst_9 {dimension_numbers = #tpu.dot_dimension_numbers<[1], [0], [0], [1], [0, 0, 1, 1], [], []>} : vector<32x32xf32>, vector<32x128xf32>, vector<32x128xf32> -> vector<32x128xf32>
    %12 = vector.extract_strided_slice %1 {offsets = [0, 1], sizes = [32, 1], strides = [1, 1]} : vector<32x6xf32> to vector<32x1xf32>
    %13 = vector.broadcast %12 : vector<32x1xf32> to vector<32x128xf32>
    %14 = arith.addf %11, %13 : vector<32x128xf32>
    %cst_10 = arith.constant 0.000000e+00 : f32
    %15 = vector.broadcast %cst_10 : f32 to vector<32x128xf32>
    %16 = arith.maximumf %14, %15 : vector<32x128xf32>
    %c1 = arith.constant 1 : index
    %c0_11 = arith.constant 0 : index
    %c0_12 = arith.constant 0 : index
    %17 = vector.load %arg3[%c1, %c0_11, %c0_12] : memref<5x32x32xf32, #tpu.memory_space<vmem>>, vector<1x32x32xf32>
    %18 = vector.shape_cast %17 : vector<1x32x32xf32> to vector<32x32xf32>
    %cst_13 = arith.constant dense<0.000000e+00> : vector<32x128xf32>
    %19 = tpu.matmul %18, %16, %cst_13 {dimension_numbers = #tpu.dot_dimension_numbers<[1], [0], [0], [1], [0, 0, 1, 1], [], []>} : vector<32x32xf32>, vector<32x128xf32>, vector<32x128xf32> -> vector<32x128xf32>
    %20 = vector.extract_strided_slice %1 {offsets = [0, 2], sizes = [32, 1], strides = [1, 1]} : vector<32x6xf32> to vector<32x1xf32>
    %21 = vector.broadcast %20 : vector<32x1xf32> to vector<32x128xf32>
    %22 = arith.addf %19, %21 : vector<32x128xf32>
    %cst_14 = arith.constant 0.000000e+00 : f32
    %23 = vector.broadcast %cst_14 : f32 to vector<32x128xf32>
    %24 = arith.maximumf %22, %23 : vector<32x128xf32>
    %c2 = arith.constant 2 : index
    %c0_15 = arith.constant 0 : index
    %c0_16 = arith.constant 0 : index
    %25 = vector.load %arg3[%c2, %c0_15, %c0_16] : memref<5x32x32xf32, #tpu.memory_space<vmem>>, vector<1x32x32xf32>
    %26 = vector.shape_cast %25 : vector<1x32x32xf32> to vector<32x32xf32>
    %cst_17 = arith.constant dense<0.000000e+00> : vector<32x128xf32>
    %27 = tpu.matmul %26, %24, %cst_17 {dimension_numbers = #tpu.dot_dimension_numbers<[1], [0], [0], [1], [0, 0, 1, 1], [], []>} : vector<32x32xf32>, vector<32x128xf32>, vector<32x128xf32> -> vector<32x128xf32>
    %28 = vector.extract_strided_slice %1 {offsets = [0, 3], sizes = [32, 1], strides = [1, 1]} : vector<32x6xf32> to vector<32x1xf32>
    %29 = vector.broadcast %28 : vector<32x1xf32> to vector<32x128xf32>
    %30 = arith.addf %27, %29 : vector<32x128xf32>
    %cst_18 = arith.constant 0.000000e+00 : f32
    %31 = vector.broadcast %cst_18 : f32 to vector<32x128xf32>
    %32 = arith.maximumf %30, %31 : vector<32x128xf32>
    %c3 = arith.constant 3 : index
    %c0_19 = arith.constant 0 : index
    %c0_20 = arith.constant 0 : index
    %33 = vector.load %arg3[%c3, %c0_19, %c0_20] : memref<5x32x32xf32, #tpu.memory_space<vmem>>, vector<1x32x32xf32>
    %34 = vector.shape_cast %33 : vector<1x32x32xf32> to vector<32x32xf32>
    %cst_21 = arith.constant dense<0.000000e+00> : vector<32x128xf32>
    %35 = tpu.matmul %34, %32, %cst_21 {dimension_numbers = #tpu.dot_dimension_numbers<[1], [0], [0], [1], [0, 0, 1, 1], [], []>} : vector<32x32xf32>, vector<32x128xf32>, vector<32x128xf32> -> vector<32x128xf32>
    %36 = vector.extract_strided_slice %1 {offsets = [0, 4], sizes = [32, 1], strides = [1, 1]} : vector<32x6xf32> to vector<32x1xf32>
    %37 = vector.broadcast %36 : vector<32x1xf32> to vector<32x128xf32>
    %38 = arith.addf %35, %37 : vector<32x128xf32>
    %cst_22 = arith.constant 0.000000e+00 : f32
    %39 = vector.broadcast %cst_22 : f32 to vector<32x128xf32>
    %40 = arith.maximumf %38, %39 : vector<32x128xf32>
    %c4 = arith.constant 4 : index
    %c0_23 = arith.constant 0 : index
    %c0_24 = arith.constant 0 : index
    %41 = vector.load %arg3[%c4, %c0_23, %c0_24] : memref<5x32x32xf32, #tpu.memory_space<vmem>>, vector<1x32x32xf32>
    %42 = vector.shape_cast %41 : vector<1x32x32xf32> to vector<32x32xf32>
    %43 = vector.extract_strided_slice %42 {offsets = [0, 0], sizes = [1, 32], strides = [1, 1]} : vector<32x32xf32> to vector<1x32xf32>
    %cst_25 = arith.constant dense<0.000000e+00> : vector<1x128xf32>
    %44 = tpu.matmul %43, %40, %cst_25 {dimension_numbers = #tpu.dot_dimension_numbers<[1], [0], [0], [1], [0, 0, 1, 1], [], []>} : vector<1x32xf32>, vector<32x128xf32>, vector<1x128xf32> -> vector<1x128xf32>
    %45 = vector.extract_strided_slice %1 {offsets = [0, 5], sizes = [1, 1], strides = [1, 1]} : vector<32x6xf32> to vector<1x1xf32>
    %46 = vector.broadcast %45 : vector<1x1xf32> to vector<1x128xf32>
    %47 = arith.addf %44, %46 : vector<1x128xf32>
    %48 = arith.negf %47 : vector<1x128xf32>
    %49 = math.exp %48 : vector<1x128xf32>
    %cst_26 = arith.constant 1.000000e+00 : f32
    %50 = vector.broadcast %cst_26 : f32 to vector<1x128xf32>
    %51 = arith.addf %50, %49 : vector<1x128xf32>
    %52 = arith.divf %50, %51 : vector<1x128xf32>
    %c0_27 = arith.constant 0 : index
    %c0_28 = arith.constant 0 : index
    %53 = vector.load %arg5[%c0_27, %c0_28] : memref<1x128xf32, #tpu.memory_space<vmem>>, vector<1x128xf32>
    tpu.vector_store %arg5[%c0_27, %c0_28], %52 {strides = array<i32>} : memref<1x128xf32, #tpu.memory_space<vmem>>, vector<1x128xf32>,
    return
  }
  func.func @transform_0(%arg0: i32) -> (i32, i32) {
    %c0_i32 = arith.constant 0 : i32
    %c0_i32_0 = arith.constant 0 : i32
    return %c0_i32, %arg0 : i32, i32
  }
  func.func @transform_1(%arg0: i32) -> (i32, i32) {
    %c0_i32 = arith.constant 0 : i32
    %c0_i32_0 = arith.constant 0 : i32
    %c0_i32_1 = arith.constant 0 : i32
    return %c0_i32, %c0_i32_0 : i32, i32
  }
  func.func @transform_2(%arg0: i32) -> (i32, i32, i32) {
    %c0_i32 = arith.constant 0 : i32
    %c0_i32_0 = arith.constant 0 : i32
    %c0_i32_1 = arith.constant 0 : i32
    %c0_i32_2 = arith.constant 0 : i32
    return %c0_i32, %c0_i32_0, %c0_i32_1 : i32, i32, i32
  }
  func.func @transform_3(%arg0: i32) -> (i32, i32) {
    %c0_i32 = arith.constant 0 : i32
    %c0_i32_0 = arith.constant 0 : i32
    %c0_i32_1 = arith.constant 0 : i32
    return %c0_i32, %c0_i32_0 : i32, i32
  }
  func.func @transform_4(%arg0: i32) -> (i32, i32) {
    %c0_i32 = arith.constant 0 : i32
    %c0_i32_0 = arith.constant 0 : i32
    return %c0_i32, %arg0 : i32, i32
  }
}

</mosaic_0001>

<llo_original>
// kernel: tpu_custom_call.1
$region0: #{tpu_custom_call.1}
  #allocation0 [shape = 'u32[]', space=smem, size = 0x4, offset = 0x4, fixed_abs, tag = 'smem constant byte address 0x4 - core index']
  #allocation1 [shape = 'u32[144,128]{1,0:T(1,128)}', space=vmem, size = 0x12000, scoped, tag = 'internal scratch']
  %s0 = inlined_call_operand.vmem [shape: f32[3,128], index: 0, kind: input, shape index: {}]
  %s1 = inlined_call_operand.vmem [shape: f32[32,3], index: 1, kind: input, shape index: {}]
  %s2 = inlined_call_operand.hbm [shape: f32[5,32,32], index: 2, kind: input, shape index: {}]
  %s3 = inlined_call_operand.vmem [shape: f32[32,6], index: 3, kind: input, shape index: {}]
  %s4 = inlined_call_operand.hbm [shape: f32[1,128], index: 4, kind: output, shape index: {}]
  %s5 = sld [smem:[#allocation0]]
  $region30: #{tpu_custom_call.1} parent=0
    _
  %s7 = ssub.s32 1, %s5
  %s8 = scalar_select 0, %s7, %s5
  $region1: #{tpu_custom_call.1} parent=0
    #allocation2 [shape = 'u8[81920]{0}', space=vmem, size = 0x14000, scoped, tag = 'input window, operand 2, single buffered']
    #allocation3 [shape = 's32[1]{0}', space=sflag, size = 0x4, scoped, tag = 'scoped memory for tpu_custom_call.1']
    #allocation4 [shape = 's32[1]{0}', space=sflag, size = 0x4, scoped, tag = 'scoped memory for tpu_custom_call.1']
    #allocation5 [shape = 'u8[512]{0}', space=vmem, size = 0x400, scoped, tag = 'output window, operand 0, single buffered']
    %9 = vsyncpa [#allocation3], 0
    %10 = vsyncpa [#allocation4], 0
    // Predicated region
    $region2: #{tpu_custom_call.1} parent=1 // pred_check
      _
    $region3: #{tpu_custom_call.1} parent=1 // pred_check_branch
      %12 = sbr.rel (0) target = $region5
    $region4: #{tpu_custom_call.1} parent=1 // pred_region
      _
    $region5: #{tpu_custom_call.1} parent=1 // pred_fallthru
      _
    // Predicated region
    $region6: #{tpu_custom_call.1} parent=1 // pred_check
      _
    $region7: #{tpu_custom_call.1} parent=1 // pred_check_branch
      %14 = sbr.rel (0) target = $region9
    $region8: #{tpu_custom_call.1} parent=1 // pred_region
      _
    $region9: #{tpu_custom_call.1} parent=1 // pred_fallthru
      _
    // Predicated region
    $region10: #{tpu_custom_call.1} parent=1 // pred_check
      _
    $region11: #{tpu_custom_call.1} parent=1 // pred_check_branch
      %16 = sbr.rel (0) target = $region13
    $region12: #{tpu_custom_call.1} parent=1 // pred_region
      %s18 = ssub.s32 2560, 2560
      %19 = vsyncadd [#allocation3], %s18
      %s20 = sshll.u32 [#allocation2], 4
      %s21 = int_to_ptr.vmem [resolvable:$true] %s20
      %26 = dma.hbm_to_vmem [thread:$0]  %s2, 2560, %s21, [#allocation3], 128, 128, 8
    $region13: #{tpu_custom_call.1} parent=1 // pred_fallthru
      _
    // Predicated region
    $region14: #{tpu_custom_call.1} parent=1 // pred_check
      _
    $region15: #{tpu_custom_call.1} parent=1 // pred_check_branch
      %28 = sbr.rel (0) target = $region17
    $region16: #{tpu_custom_call.1} parent=1 // pred_region
      _
    $region17: #{tpu_custom_call.1} parent=1 // pred_fallthru
      _
    // Predicated region
    $region18: #{tpu_custom_call.1} parent=1 // pred_check
      _
    $region19: #{tpu_custom_call.1} parent=1 // pred_check_branch
      %30 = sbr.rel (0) target = $region21
    $region20: #{tpu_custom_call.1} parent=1 // pred_region
      %31 = dma.done [#allocation3], 2560
    $region21: #{tpu_custom_call.1} parent=1 // pred_fallthru
      _
    %v32 = vld [vmem:[%s0] sm:$0x7]
    %v33 = vld [vmem:[%s3] sm:$0xff]
    %v34 = vld [vmem:[%s3 + $0x8] sm:$0xff]
    %v35 = vld [vmem:[%s3 + $0x10] sm:$0xff]
    %v36 = vld [vmem:[%s3 + $0x18] sm:$0xff]
    %v37 = vld [vmem:[%s1] sm:$0xff]
    %v38 = vld [vmem:[%s1 + $0x8] sm:$0xff]
    %v39 = vld [vmem:[%s1 + $0x10] sm:$0xff]
    %v40 = vld [vmem:[%s1 + $0x18] sm:$0xff]
    %42 = vset.pattern.permute.xlu0 0
    %43 = vperm.xlu0 %42, %v33
    %v44 = vpop.permute.xlu0 %43
    %47 = vset.pattern.permute.xlu0 0
    %48 = vperm.xlu0 %47, %v34
    %v49 = vpop.permute.xlu0 %48
    %52 = vset.pattern.permute.xlu0 0
    %53 = vperm.xlu0 %52, %v35
    %v54 = vpop.permute.xlu0 %53
    %57 = vset.pattern.permute.xlu0 0
    %58 = vperm.xlu0 %57, %v36
    %v59 = vpop.permute.xlu0 %58
    %vm61 = vcmask 23552
    %v63 = vsel %vm61, %v37, 0
    %v66 = vsel %vm61, %v38, 0
    %v69 = vsel %vm61, %v39, 0
    %v72 = vsel %vm61, %v40, 0
    %vm74 = vcmask 1042432
    %v76 = vsel %vm74, %v32, 0
    %78 = vmatprep.subr.mxu0 0.0
    %79 = vmatpush1.msra.mxu0 %v76
    %80 = vmatprep.subr.mxu0 0.0
    %81 = vmatpush1.msra.mxu0 0.0
    %82 = vmatprep.subr.mxu0 0.0
    %83 = vmatpush1.msra.mxu0 0.0
    %84 = vmatprep.subr.mxu0 0.0
    %85 = vmatpush1.msra.mxu0 0.0
    %86 = vmatprep.subr.mxu0 0.0
    %87 = vmatpush1.msra.mxu0 0.0
    %88 = vmatprep.subr.mxu0 0.0
    %89 = vmatpush1.msra.mxu0 0.0
    %90 = vmatprep.subr.mxu0 0.0
    %91 = vmatpush1.msra.mxu0 0.0
    %92 = vmatprep.subr.mxu0 0.0
    %93 = vmatpush1.msra.mxu0 0.0
    %94 = vmatprep.subr.mxu0 0.0
    %95 = vmatpush1.msra.mxu0 0.0
    %96 = vmatprep.subr.mxu0 0.0
    %97 = vmatpush1.msra.mxu0 0.0
    %98 = vmatprep.subr.mxu0 0.0
    %99 = vmatpush1.msra.mxu0 0.0
    %100 = vmatprep.subr.mxu0 0.0
    %101 = vmatpush1.msra.mxu0 0.0
    %102 = vmatprep.subr.mxu0 0.0
    %103 = vmatpush1.msra.mxu0 0.0
    %104 = vmatprep.subr.mxu0 0.0
    %105 = vmatpush1.msra.mxu0 0.0
    %106 = vmatprep.subr.mxu0 0.0
    %107 = vmatpush1.msra.mxu0 0.0
    %108 = vmatprep.subr.mxu0 0.0
    %109 = vmatpush1.msra.mxu0 0.0
    %110 = vmatprep.subr.mxu0 0.0
    %111 = vmatpush1.msra.mxu0 0.0
    %112 = vmatprep.subr.mxu0 0.0
    %113 = vmatpush1.msra.mxu0 0.0
    %114 = vmatprep.subr.mxu0 0.0
    %115 = vmatpush1.msra.mxu0 0.0
    %116 = vmatprep.subr.mxu0 0.0
    %117 = vmatpush1.msra.mxu0 0.0
    %118 = vmatprep.subr.mxu0 0.0
    %119 = vmatpush1.msra.mxu0 0.0
    %120 = vmatprep.subr.mxu0 0.0
    %121 = vmatpush1.msra.mxu0 0.0
    %122 = vmatprep.subr.mxu0 0.0
    %123 = vmatpush1.msra.mxu0 0.0
    %124 = vmatprep.subr.mxu0 0.0
    %125 = vmatpush1.msra.mxu0 0.0
    %126 = vmatprep.subr.mxu0 0.0
    %127 = vmatpush1.msra.mxu0 0.0
    %128 = vmatprep.subr.mxu0 0.0
    %129 = vmatpush1.msra.mxu0 0.0
    %130 = vmatprep.subr.mxu0 0.0
    %131 = vmatpush1.msra.mxu0 0.0
    %132 = vmatprep.subr.mxu0 0.0
    %133 = vmatpush1.msra.mxu0 0.0
    %134 = vmatprep.subr.mxu0 0.0
    %135 = vmatpush1.msra.mxu0 0.0
    %136 = vmatprep.subr.mxu0 0.0
    %137 = vmatpush1.msra.mxu0 0.0
    %138 = vmatprep.subr.mxu0 0.0
    %139 = vmatpush1.msra.mxu0 0.0
    %140 = vmatprep.subr.mxu0 0.0
    %141 = vmatpush1.msra.mxu0 0.0
    %142 = vmatprep.mubr.f32.mxu0 0.0
    %143 = vmatmul.mubr.f32.gmra.mrb[0].mxu0 %v63
    %v144 = vpop.f32.mrb[0].mxu0
    %v145 = vadd.f32 %v44, %v144
    %v146 = vpop.f32.mrb[0].mxu0
    %147 = vmatprep.mubr.f32.mxu0 0.0
    %148 = vmatmul.mubr.f32.gmra.mrb[0].mxu0 %v66
    %v149 = vpop.f32.mrb[0].mxu0
    %v150 = vadd.f32 %v49, %v149
    %v151 = vpop.f32.mrb[0].mxu0
    %152 = vmatprep.mubr.f32.mxu0 0.0
    %153 = vmatmul.mubr.f32.gmra.mrb[0].mxu0 %v69
    %v154 = vpop.f32.mrb[0].mxu0
    %v155 = vadd.f32 %v54, %v154
    %v156 = vpop.f32.mrb[0].mxu0
    %157 = vmatprep.mubr.f32.mxu0 0.0
    %158 = vmatmul.mubr.f32.gmra.mrb[0].mxu0 %v72
    %v159 = vpop.f32.mrb[0].mxu0
    %v160 = vadd.f32 %v59, %v159
    %v161 = vpop.f32.mrb[0].mxu0
    %162 = vdwg.mxu0
    %v163 = vmax.f32 %v145, 0.0
    %v164 = vmax.f32 %v150, 0.0
    %v165 = vmax.f32 %v155, 0.0
    %v166 = vmax.f32 %v160, 0.0
    %v167 = vld [vmem:[#allocation2] sm:$0xff]
    %v168 = vld [vmem:[#allocation2 + $0x8] sm:$0xff]
    %v169 = vld [vmem:[#allocation2 + $0x10] sm:$0xff]
    %v170 = vld [vmem:[#allocation2 + $0x18] sm:$0xff]
    %171 = vset.pattern.permute.xlu0 1
    %172 = vperm.xlu0 %171, %v33
    %v173 = vpop.permute.xlu0 %172
    %175 = vset.pattern.permute.xlu0 1
    %176 = vperm.xlu0 %175, %v34
    %v177 = vpop.permute.xlu0 %176
    %179 = vset.pattern.permute.xlu0 1
    %180 = vperm.xlu0 %179, %v35
    %v181 = vpop.permute.xlu0 %180
    %183 = vset.pattern.permute.xlu0 1
    %184 = vperm.xlu0 %183, %v36
    %v185 = vpop.permute.xlu0 %184
    %vm187 = vcmask 261120
    %v189 = vsel %vm187, %v167, 0
    %v192 = vsel %vm187, %v168, 0
    %v195 = vsel %vm187, %v169, 0
    %v198 = vsel %vm187, %v170, 0
    %200 = vmatprep.subr.mxu0 0.0
    %201 = vmatpush1.msra.mxu0 %v163
    %202 = vmatprep.subr.mxu0 0.0
    %203 = vmatpush1.msra.mxu0 %v164
    %204 = vmatprep.subr.mxu0 0.0
    %205 = vmatpush1.msra.mxu0 %v165
    %206 = vmatprep.subr.mxu0 0.0
    %207 = vmatpush1.msra.mxu0 %v166
    %208 = vmatprep.subr.mxu0 0.0
    %209 = vmatpush1.msra.mxu0 0.0
    %210 = vmatprep.subr.mxu0 0.0
    %211 = vmatpush1.msra.mxu0 0.0
    %212 = vmatprep.subr.mxu0 0.0
    %213 = vmatpush1.msra.mxu0 0.0
    %214 = vmatprep.subr.mxu0 0.0
    %215 = vmatpush1.msra.mxu0 0.0
    %216 = vmatprep.subr.mxu0 0.0
    %217 = vmatpush1.msra.mxu0 0.0
    %218 = vmatprep.subr.mxu0 0.0
    %219 = vmatpush1.msra.mxu0 0.0
    %220 = vmatprep.subr.mxu0 0.0
    %221 = vmatpush1.msra.mxu0 0.0
    %222 = vmatprep.subr.mxu0 0.0
    %223 = vmatpush1.msra.mxu0 0.0
    %224 = vmatprep.subr.mxu0 0.0
    %225 = vmatpush1.msra.mxu0 0.0
    %226 = vmatprep.subr.mxu0 0.0
    %227 = vmatpush1.msra.mxu0 0.0
    %228 = vmatprep.subr.mxu0 0.0
    %229 = vmatpush1.msra.mxu0 0.0
    %230 = vmatprep.subr.mxu0 0.0
    %231 = vmatpush1.msra.mxu0 0.0
    %232 = vmatprep.subr.mxu0 0.0
    %233 = vmatpush1.msra.mxu0 0.0
    %234 = vmatprep.subr.mxu0 0.0
    %235 = vmatpush1.msra.mxu0 0.0
    %236 = vmatprep.subr.mxu0 0.0
    %237 = vmatpush1.msra.mxu0 0.0
    %238 = vmatprep.subr.mxu0 0.0
    %239 = vmatpush1.msra.mxu0 0.0
    %240 = vmatprep.subr.mxu0 0.0
    %241 = vmatpush1.msra.mxu0 0.0
    %242 = vmatprep.subr.mxu0 0.0
    %243 = vmatpush1.msra.mxu0 0.0
    %244 = vmatprep.subr.mxu0 0.0
    %245 = vmatpush1.msra.mxu0 0.0
    %246 = vmatprep.subr.mxu0 0.0
    %247 = vmatpush1.msra.mxu0 0.0
    %248 = vmatprep.subr.mxu0 0.0
    %249 = vmatpush1.msra.mxu0 0.0
    %250 = vmatprep.subr.mxu0 0.0
    %251 = vmatpush1.msra.mxu0 0.0
    %252 = vmatprep.subr.mxu0 0.0
    %253 = vmatpush1.msra.mxu0 0.0
    %254 = vmatprep.subr.mxu0 0.0
    %255 = vmatpush1.msra.mxu0 0.0
    %256 = vmatprep.subr.mxu0 0.0
    %257 = vmatpush1.msra.mxu0 0.0
    %258 = vmatprep.subr.mxu0 0.0
    %259 = vmatpush1.msra.mxu0 0.0
    %260 = vmatprep.subr.mxu0 0.0
    %261 = vmatpush1.msra.mxu0 0.0
    %262 = vmatprep.subr.mxu0 0.0
    %263 = vmatpush1.msra.mxu0 0.0
    %264 = vmatprep.mubr.f32.mxu0 0.0
    %265 = vmatmul.mubr.f32.gmra.mrb[0].mxu0 %v189
    %v266 = vpop.f32.mrb[0].mxu0
    %v267 = vadd.f32 %v173, %v266
    %v268 = vpop.f32.mrb[0].mxu0
    %269 = vmatprep.mubr.f32.mxu0 0.0
    %270 = vmatmul.mubr.f32.gmra.mrb[0].mxu0 %v192
    %v271 = vpop.f32.mrb[0].mxu0
    %v272 = vadd.f32 %v177, %v271
    %v273 = vpop.f32.mrb[0].mxu0
    %274 = vmatprep.mubr.f32.mxu0 0.0
    %275 = vmatmul.mubr.f32.gmra.mrb[0].mxu0 %v195
    %v276 = vpop.f32.mrb[0].mxu0
    %v277 = vadd.f32 %v181, %v276
    %v278 = vpop.f32.mrb[0].mxu0
    %279 = vmatprep.mubr.f32.mxu0 0.0
    %280 = vmatmul.mubr.f32.gmra.mrb[0].mxu0 %v198
    %v281 = vpop.f32.mrb[0].mxu0
    %v282 = vadd.f32 %v185, %v281
    %v283 = vpop.f32.mrb[0].mxu0
    %284 = vdwg.mxu0
    %v285 = vmax.f32 %v267, 0.0
    %v286 = vmax.f32 %v272, 0.0
    %v287 = vmax.f32 %v277, 0.0
    %v288 = vmax.f32 %v282, 0.0
    %s289 = scalar_lea.vmem [#allocation2], 32
    %v290 = vld [vmem:[%s289] sm:$0xff]
    %v291 = vld [vmem:[%s289 + $0x8] sm:$0xff]
    %v292 = vld [vmem:[%s289 + $0x10] sm:$0xff]
    %v293 = vld [vmem:[%s289 + $0x18] sm:$0xff]
    %294 = vset.pattern.permute.xlu0 2
    %295 = vperm.xlu0 %294, %v33
    %v296 = vpop.permute.xlu0 %295
    %298 = vset.pattern.permute.xlu0 2
    %299 = vperm.xlu0 %298, %v34
    %v300 = vpop.permute.xlu0 %299
    %302 = vset.pattern.permute.xlu0 2
    %303 = vperm.xlu0 %302, %v35
    %v304 = vpop.permute.xlu0 %303
    %306 = vset.pattern.permute.xlu0 2
    %307 = vperm.xlu0 %306, %v36
    %v308 = vpop.permute.xlu0 %307
    %v311 = vsel %vm187, %v290, 0
    %v314 = vsel %vm187, %v291, 0
    %v317 = vsel %vm187, %v292, 0
    %v320 = vsel %vm187, %v293, 0
    %322 = vmatprep.subr.mxu0 0.0
    %323 = vmatpush1.msra.mxu0 %v285
    %324 = vmatprep.subr.mxu0 0.0
    %325 = vmatpush1.msra.mxu0 %v286
    %326 = vmatprep.subr.mxu0 0.0
    %327 = vmatpush1.msra.mxu0 %v287
    %328 = vmatprep.subr.mxu0 0.0
    %329 = vmatpush1.msra.mxu0 %v288
    %330 = vmatprep.subr.mxu0 0.0
    %331 = vmatpush1.msra.mxu0 0.0
    %332 = vmatprep.subr.mxu0 0.0
    %333 = vmatpush1.msra.mxu0 0.0
    %334 = vmatprep.subr.mxu0 0.0
    %335 = vmatpush1.msra.mxu0 0.0
    %336 = vmatprep.subr.mxu0 0.0
    %337 = vmatpush1.msra.mxu0 0.0
    %338 = vmatprep.subr.mxu0 0.0
    %339 = vmatpush1.msra.mxu0 0.0
    %340 = vmatprep.subr.mxu0 0.0
    %341 = vmatpush1.msra.mxu0 0.0
    %342 = vmatprep.subr.mxu0 0.0
    %343 = vmatpush1.msra.mxu0 0.0
    %344 = vmatprep.subr.mxu0 0.0
    %345 = vmatpush1.msra.mxu0 0.0
    %346 = vmatprep.subr.mxu0 0.0
    %347 = vmatpush1.msra.mxu0 0.0
    %348 = vmatprep.subr.mxu0 0.0
    %349 = vmatpush1.msra.mxu0 0.0
    %350 = vmatprep.subr.mxu0 0.0
    %351 = vmatpush1.msra.mxu0 0.0
    %352 = vmatprep.subr.mxu0 0.0
    %353 = vmatpush1.msra.mxu0 0.0
    %354 = vmatprep.subr.mxu0 0.0
    %355 = vmatpush1.msra.mxu0 0.0
    %356 = vmatprep.subr.mxu0 0.0
    %357 = vmatpush1.msra.mxu0 0.0
    %358 = vmatprep.subr.mxu0 0.0
    %359 = vmatpush1.msra.mxu0 0.0
    %360 = vmatprep.subr.mxu0 0.0
    %361 = vmatpush1.msra.mxu0 0.0
    %362 = vmatprep.subr.mxu0 0.0
    %363 = vmatpush1.msra.mxu0 0.0
    %364 = vmatprep.subr.mxu0 0.0
    %365 = vmatpush1.msra.mxu0 0.0
    %366 = vmatprep.subr.mxu0 0.0
    %367 = vmatpush1.msra.mxu0 0.0
    %368 = vmatprep.subr.mxu0 0.0
    %369 = vmatpush1.msra.mxu0 0.0
    %370 = vmatprep.subr.mxu0 0.0
    %371 = vmatpush1.msra.mxu0 0.0
    %372 = vmatprep.subr.mxu0 0.0
    %373 = vmatpush1.msra.mxu0 0.0
    %374 = vmatprep.subr.mxu0 0.0
    %375 = vmatpush1.msra.mxu0 0.0
    %376 = vmatprep.subr.mxu0 0.0
    %377 = vmatpush1.msra.mxu0 0.0
    %378 = vmatprep.subr.mxu0 0.0
    %379 = vmatpush1.msra.mxu0 0.0
    %380 = vmatprep.subr.mxu0 0.0
    %381 = vmatpush1.msra.mxu0 0.0
    %382 = vmatprep.subr.mxu0 0.0
    %383 = vmatpush1.msra.mxu0 0.0
    %384 = vmatprep.subr.mxu0 0.0
    %385 = vmatpush1.msra.mxu0 0.0
    %386 = vmatprep.mubr.f32.mxu0 0.0
    %387 = vmatmul.mubr.f32.gmra.mrb[0].mxu0 %v311
    %v388 = vpop.f32.mrb[0].mxu0
    %v389 = vadd.f32 %v296, %v388
    %v390 = vpop.f32.mrb[0].mxu0
    %391 = vmatprep.mubr.f32.mxu0 0.0
    %392 = vmatmul.mubr.f32.gmra.mrb[0].mxu0 %v314
    %v393 = vpop.f32.mrb[0].mxu0
    %v394 = vadd.f32 %v300, %v393
    %v395 = vpop.f32.mrb[0].mxu0
    %396 = vmatprep.mubr.f32.mxu0 0.0
    %397 = vmatmul.mubr.f32.gmra.mrb[0].mxu0 %v317
    %v398 = vpop.f32.mrb[0].mxu0
    %v399 = vadd.f32 %v304, %v398
    %v400 = vpop.f32.mrb[0].mxu0
    %401 = vmatprep.mubr.f32.mxu0 0.0
    %402 = vmatmul.mubr.f32.gmra.mrb[0].mxu0 %v320
    %v403 = vpop.f32.mrb[0].mxu0
    %v404 = vadd.f32 %v308, %v403
    %v405 = vpop.f32.mrb[0].mxu0
    %406 = vdwg.mxu0
    %v407 = vmax.f32 %v389, 0.0
    %v408 = vmax.f32 %v394, 0.0
    %v409 = vmax.f32 %v399, 0.0
    %v410 = vmax.f32 %v404, 0.0
    %s411 = scalar_lea.vmem [#allocation2], 64
    %v412 = vld [vmem:[%s411] sm:$0xff]
    %v413 = vld [vmem:[%s411 + $0x8] sm:$0xff]
    %v414 = vld [vmem:[%s411 + $0x10] sm:$0xff]
    %v415 = vld [vmem:[%s411 + $0x18] sm:$0xff]
    %416 = vset.pattern.permute.xlu0 3
    %417 = vperm.xlu0 %416, %v33
    %v418 = vpop.permute.xlu0 %417
    %420 = vset.pattern.permute.xlu0 3
    %421 = vperm.xlu0 %420, %v34
    %v422 = vpop.permute.xlu0 %421
    %424 = vset.pattern.permute.xlu0 3
    %425 = vperm.xlu0 %424, %v35
    %v426 = vpop.permute.xlu0 %425
    %428 = vset.pattern.permute.xlu0 3
    %429 = vperm.xlu0 %428, %v36
    %v430 = vpop.permute.xlu0 %429
    %v433 = vsel %vm187, %v412, 0
    %v436 = vsel %vm187, %v413, 0
    %v439 = vsel %vm187, %v414, 0
    %v442 = vsel %vm187, %v415, 0
    %444 = vmatprep.subr.mxu0 0.0
    %445 = vmatpush1.msra.mxu0 %v407
    %446 = vmatprep.subr.mxu0 0.0
    %447 = vmatpush1.msra.mxu0 %v408
    %448 = vmatprep.subr.mxu0 0.0
    %449 = vmatpush1.msra.mxu0 %v409
    %450 = vmatprep.subr.mxu0 0.0
    %451 = vmatpush1.msra.mxu0 %v410
    %452 = vmatprep.subr.mxu0 0.0
    %453 = vmatpush1.msra.mxu0 0.0
    %454 = vmatprep.subr.mxu0 0.0
    %455 = vmatpush1.msra.mxu0 0.0
    %456 = vmatprep.subr.mxu0 0.0
    %457 = vmatpush1.msra.mxu0 0.0
    %458 = vmatprep.subr.mxu0 0.0
    %459 = vmatpush1.msra.mxu0 0.0
    %460 = vmatprep.subr.mxu0 0.0
    %461 = vmatpush1.msra.mxu0 0.0
    %462 = vmatprep.subr.mxu0 0.0
    %463 = vmatpush1.msra.mxu0 0.0
    %464 = vmatprep.subr.mxu0 0.0
    %465 = vmatpush1.msra.mxu0 0.0
    %466 = vmatprep.subr.mxu0 0.0
    %467 = vmatpush1.msra.mxu0 0.0
    %468 = vmatprep.subr.mxu0 0.0
    %469 = vmatpush1.msra.mxu0 0.0
    %470 = vmatprep.subr.mxu0 0.0
    %471 = vmatpush1.msra.mxu0 0.0
    %472 = vmatprep.subr.mxu0 0.0
    %473 = vmatpush1.msra.mxu0 0.0
    %474 = vmatprep.subr.mxu0 0.0
    %475 = vmatpush1.msra.mxu0 0.0
    %476 = vmatprep.subr.mxu0 0.0
    %477 = vmatpush1.msra.mxu0 0.0
    %478 = vmatprep.subr.mxu0 0.0
    %479 = vmatpush1.msra.mxu0 0.0
    %480 = vmatprep.subr.mxu0 0.0
    %481 = vmatpush1.msra.mxu0 0.0
    %482 = vmatprep.subr.mxu0 0.0
    %483 = vmatpush1.msra.mxu0 0.0
    %484 = vmatprep.subr.mxu0 0.0
    %485 = vmatpush1.msra.mxu0 0.0
    %486 = vmatprep.subr.mxu0 0.0
    %487 = vmatpush1.msra.mxu0 0.0
    %488 = vmatprep.subr.mxu0 0.0
    %489 = vmatpush1.msra.mxu0 0.0
    %490 = vmatprep.subr.mxu0 0.0
    %491 = vmatpush1.msra.mxu0 0.0
    %492 = vmatprep.subr.mxu0 0.0
    %493 = vmatpush1.msra.mxu0 0.0
    %494 = vmatprep.subr.mxu0 0.0
    %495 = vmatpush1.msra.mxu0 0.0
    %496 = vmatprep.subr.mxu0 0.0
    %497 = vmatpush1.msra.mxu0 0.0
    %498 = vmatprep.subr.mxu0 0.0
    %499 = vmatpush1.msra.mxu0 0.0
    %500 = vmatprep.subr.mxu0 0.0
    %501 = vmatpush1.msra.mxu0 0.0
    %502 = vmatprep.subr.mxu0 0.0
    %503 = vmatpush1.msra.mxu0 0.0
    %504 = vmatprep.subr.mxu0 0.0
    %505 = vmatpush1.msra.mxu0 0.0
    %506 = vmatprep.subr.mxu0 0.0
    %507 = vmatpush1.msra.mxu0 0.0
    %508 = vmatprep.mubr.f32.mxu0 0.0
    %509 = vmatmul.mubr.f32.gmra.mrb[0].mxu0 %v433
    %v510 = vpop.f32.mrb[0].mxu0
    %v511 = vadd.f32 %v418, %v510
    %v512 = vpop.f32.mrb[0].mxu0
    %513 = vmatprep.mubr.f32.mxu0 0.0
    %514 = vmatmul.mubr.f32.gmra.mrb[0].mxu0 %v436
    %v515 = vpop.f32.mrb[0].mxu0
    %v516 = vadd.f32 %v422, %v515
    %v517 = vpop.f32.mrb[0].mxu0
    %518 = vmatprep.mubr.f32.mxu0 0.0
    %519 = vmatmul.mubr.f32.gmra.mrb[0].mxu0 %v439
    %v520 = vpop.f32.mrb[0].mxu0
    %v521 = vadd.f32 %v426, %v520
    %v522 = vpop.f32.mrb[0].mxu0
    %523 = vmatprep.mubr.f32.mxu0 0.0
    %524 = vmatmul.mubr.f32.gmra.mrb[0].mxu0 %v442
    %v525 = vpop.f32.mrb[0].mxu0
    %v526 = vadd.f32 %v430, %v525
    %v527 = vpop.f32.mrb[0].mxu0
    %528 = vdwg.mxu0
    %v529 = vmax.f32 %v511, 0.0
    %v530 = vmax.f32 %v516, 0.0
    %v531 = vmax.f32 %v521, 0.0
    %v532 = vmax.f32 %v526, 0.0
    %s533 = scalar_lea.vmem [#allocation2], 96
    %v534 = vld [vmem:[%s533] sm:$0xff]
    %v535 = vld [vmem:[%s533 + $0x8] sm:$0xff]
    %v536 = vld [vmem:[%s533 + $0x10] sm:$0xff]
    %v537 = vld [vmem:[%s533 + $0x18] sm:$0xff]
    %538 = vset.pattern.permute.xlu0 4
    %539 = vperm.xlu0 %538, %v33
    %v540 = vpop.permute.xlu0 %539
    %542 = vset.pattern.permute.xlu0 4
    %543 = vperm.xlu0 %542, %v34
    %v544 = vpop.permute.xlu0 %543
    %546 = vset.pattern.permute.xlu0 4
    %547 = vperm.xlu0 %546, %v35
    %v548 = vpop.permute.xlu0 %547
    %550 = vset.pattern.permute.xlu0 4
    %551 = vperm.xlu0 %550, %v36
    %v552 = vpop.permute.xlu0 %551
    %v555 = vsel %vm187, %v534, 0
    %v558 = vsel %vm187, %v535, 0
    %v561 = vsel %vm187, %v536, 0
    %v564 = vsel %vm187, %v537, 0
    %566 = vmatprep.subr.mxu0 0.0
    %567 = vmatpush1.msra.mxu0 %v529
    %568 = vmatprep.subr.mxu0 0.0
    %569 = vmatpush1.msra.mxu0 %v530
    %570 = vmatprep.subr.mxu0 0.0
    %571 = vmatpush1.msra.mxu0 %v531
    %572 = vmatprep.subr.mxu0 0.0
    %573 = vmatpush1.msra.mxu0 %v532
    %574 = vmatprep.subr.mxu0 0.0
    %575 = vmatpush1.msra.mxu0 0.0
    %576 = vmatprep.subr.mxu0 0.0
    %577 = vmatpush1.msra.mxu0 0.0
    %578 = vmatprep.subr.mxu0 0.0
    %579 = vmatpush1.msra.mxu0 0.0
    %580 = vmatprep.subr.mxu0 0.0
    %581 = vmatpush1.msra.mxu0 0.0
    %582 = vmatprep.subr.mxu0 0.0
    %583 = vmatpush1.msra.mxu0 0.0
    %584 = vmatprep.subr.mxu0 0.0
    %585 = vmatpush1.msra.mxu0 0.0
    %586 = vmatprep.subr.mxu0 0.0
    %587 = vmatpush1.msra.mxu0 0.0
    %588 = vmatprep.subr.mxu0 0.0
    %589 = vmatpush1.msra.mxu0 0.0
    %590 = vmatprep.subr.mxu0 0.0
    %591 = vmatpush1.msra.mxu0 0.0
    %592 = vmatprep.subr.mxu0 0.0
    %593 = vmatpush1.msra.mxu0 0.0
    %594 = vmatprep.subr.mxu0 0.0
    %595 = vmatpush1.msra.mxu0 0.0
    %596 = vmatprep.subr.mxu0 0.0
    %597 = vmatpush1.msra.mxu0 0.0
    %598 = vmatprep.subr.mxu0 0.0
    %599 = vmatpush1.msra.mxu0 0.0
    %600 = vmatprep.subr.mxu0 0.0
    %601 = vmatpush1.msra.mxu0 0.0
    %602 = vmatprep.subr.mxu0 0.0
    %603 = vmatpush1.msra.mxu0 0.0
    %604 = vmatprep.subr.mxu0 0.0
    %605 = vmatpush1.msra.mxu0 0.0
    %606 = vmatprep.subr.mxu0 0.0
    %607 = vmatpush1.msra.mxu0 0.0
    %608 = vmatprep.subr.mxu0 0.0
    %609 = vmatpush1.msra.mxu0 0.0
    %610 = vmatprep.subr.mxu0 0.0
    %611 = vmatpush1.msra.mxu0 0.0
    %612 = vmatprep.subr.mxu0 0.0
    %613 = vmatpush1.msra.mxu0 0.0
    %614 = vmatprep.subr.mxu0 0.0
    %615 = vmatpush1.msra.mxu0 0.0
    %616 = vmatprep.subr.mxu0 0.0
    %617 = vmatpush1.msra.mxu0 0.0
    %618 = vmatprep.subr.mxu0 0.0
    %619 = vmatpush1.msra.mxu0 0.0
    %620 = vmatprep.subr.mxu0 0.0
    %621 = vmatpush1.msra.mxu0 0.0
    %622 = vmatprep.subr.mxu0 0.0
    %623 = vmatpush1.msra.mxu0 0.0
    %624 = vmatprep.subr.mxu0 0.0
    %625 = vmatpush1.msra.mxu0 0.0
    %626 = vmatprep.subr.mxu0 0.0
    %627 = vmatpush1.msra.mxu0 0.0
    %628 = vmatprep.subr.mxu0 0.0
    %629 = vmatpush1.msra.mxu0 0.0
    %630 = vmatprep.mubr.f32.mxu0 0.0
    %631 = vmatmul.mubr.f32.gmra.mrb[0].mxu0 %v555
    %v632 = vpop.f32.mrb[0].mxu0
    %v633 = vadd.f32 %v540, %v632
    %v634 = vpop.f32.mrb[0].mxu0
    %635 = vmatprep.mubr.f32.mxu0 0.0
    %636 = vmatmul.mubr.f32.gmra.mrb[0].mxu0 %v558
    %v637 = vpop.f32.mrb[0].mxu0
    %v638 = vadd.f32 %v544, %v637
    %v639 = vpop.f32.mrb[0].mxu0
    %640 = vmatprep.mubr.f32.mxu0 0.0
    %641 = vmatmul.mubr.f32.gmra.mrb[0].mxu0 %v561
    %v642 = vpop.f32.mrb[0].mxu0
    %v643 = vadd.f32 %v548, %v642
    %v644 = vpop.f32.mrb[0].mxu0
    %645 = vmatprep.mubr.f32.mxu0 0.0
    %646 = vmatmul.mubr.f32.gmra.mrb[0].mxu0 %v564
    %v647 = vpop.f32.mrb[0].mxu0
    %v648 = vadd.f32 %v552, %v647
    %v649 = vpop.f32.mrb[0].mxu0
    %650 = vdwg.mxu0
    %v651 = vmax.f32 %v633, 0.0
    %v652 = vmax.f32 %v638, 0.0
    %v653 = vmax.f32 %v643, 0.0
    %v654 = vmax.f32 %v648, 0.0
    %s655 = scalar_lea.vmem [#allocation2], 128
    %v656 = vld [vmem:[%s655] sm:$0xff]
    %657 = vset.pattern.permute.xlu0 5
    %658 = vperm.xlu0 %657, %v33
    %v659 = vpop.permute.xlu0 %658
    %v662 = vsel %vm187, %v656, 0
    %664 = vmatprep.subr.mxu0 0.0
    %665 = vmatpush1.msra.mxu0 %v651
    %666 = vmatprep.subr.mxu0 0.0
    %667 = vmatpush1.msra.mxu0 %v652
    %668 = vmatprep.subr.mxu0 0.0
    %669 = vmatpush1.msra.mxu0 %v653
    %670 = vmatprep.subr.mxu0 0.0
    %671 = vmatpush1.msra.mxu0 %v654
    %672 = vmatprep.subr.mxu0 0.0
    %673 = vmatpush1.msra.mxu0 0.0
    %674 = vmatprep.subr.mxu0 0.0
    %675 = vmatpush1.msra.mxu0 0.0
    %676 = vmatprep.subr.mxu0 0.0
    %677 = vmatpush1.msra.mxu0 0.0
    %678 = vmatprep.subr.mxu0 0.0
    %679 = vmatpush1.msra.mxu0 0.0
    %680 = vmatprep.subr.mxu0 0.0
    %681 = vmatpush1.msra.mxu0 0.0
    %682 = vmatprep.subr.mxu0 0.0
    %683 = vmatpush1.msra.mxu0 0.0
    %684 = vmatprep.subr.mxu0 0.0
    %685 = vmatpush1.msra.mxu0 0.0
    %686 = vmatprep.subr.mxu0 0.0
    %687 = vmatpush1.msra.mxu0 0.0
    %688 = vmatprep.subr.mxu0 0.0
    %689 = vmatpush1.msra.mxu0 0.0
    %690 = vmatprep.subr.mxu0 0.0
    %691 = vmatpush1.msra.mxu0 0.0
    %692 = vmatprep.subr.mxu0 0.0
    %693 = vmatpush1.msra.mxu0 0.0
    %694 = vmatprep.subr.mxu0 0.0
    %695 = vmatpush1.msra.mxu0 0.0
    %696 = vmatprep.subr.mxu0 0.0
    %697 = vmatpush1.msra.mxu0 0.0
    %698 = vmatprep.subr.mxu0 0.0
    %699 = vmatpush1.msra.mxu0 0.0
    %700 = vmatprep.subr.mxu0 0.0
    %701 = vmatpush1.msra.mxu0 0.0
    %702 = vmatprep.subr.mxu0 0.0
    %703 = vmatpush1.msra.mxu0 0.0
    %704 = vmatprep.subr.mxu0 0.0
    %705 = vmatpush1.msra.mxu0 0.0
    %706 = vmatprep.subr.mxu0 0.0
    %707 = vmatpush1.msra.mxu0 0.0
    %708 = vmatprep.subr.mxu0 0.0
    %709 = vmatpush1.msra.mxu0 0.0
    %710 = vmatprep.subr.mxu0 0.0
    %711 = vmatpush1.msra.mxu0 0.0
    %712 = vmatprep.subr.mxu0 0.0
    %713 = vmatpush1.msra.mxu0 0.0
    %714 = vmatprep.subr.mxu0 0.0
    %715 = vmatpush1.msra.mxu0 0.0
    %716 = vmatprep.subr.mxu0 0.0
    %717 = vmatpush1.msra.mxu0 0.0
    %718 = vmatprep.subr.mxu0 0.0
    %719 = vmatpush1.msra.mxu0 0.0
    %720 = vmatprep.subr.mxu0 0.0
    %721 = vmatpush1.msra.mxu0 0.0
    %722 = vmatprep.subr.mxu0 0.0
    %723 = vmatpush1.msra.mxu0 0.0
    %724 = vmatprep.subr.mxu0 0.0
    %725 = vmatpush1.msra.mxu0 0.0
    %726 = vmatprep.subr.mxu0 0.0
    %727 = vmatpush1.msra.mxu0 0.0
    %728 = vmatprep.mubr.f32.mxu0 0.0
    %729 = vmatmul.mubr.f32.gmra.mrb[0].mxu0 %v662
    %v730 = vpop.f32.mrb[0].mxu0
    %v731 = vadd.f32 %v659, %v730
    %v732 = vpop.f32.mrb[0].mxu0
    %733 = vdwg.mxu0
    %v734 = vxor.u32 %v731, 2147483648
    %v735 = vmul.f32 %v734, 1.442695
    %v736 = vpow.pop %v735
    %v737 = vadd.f32 %v736, 1.0
    %v738 = vrcp.pop %v737
    %v739 = vmul.f32 1.0, %v738
    %740 = vst [vmem:[#allocation5] sm:$0x1] %v739
    // Predicated region
    $region22: #{tpu_custom_call.1} parent=1 // pred_check
      _
    $region23: #{tpu_custom_call.1} parent=1 // pred_check_branch
      %742 = sbr.rel (0) target = $region25
    $region24: #{tpu_custom_call.1} parent=1 // pred_region
      %s744 = ssub.s32 16, 16
      %745 = vsyncadd [#allocation4], %s744
      %s747 = sshll.u32 [#allocation5], 4
      %s748 = int_to_ptr.vmem [resolvable:$true] %s747
      %750 = dma.vmem_to_hbm [thread:$0]  %s748, 16, %s4, [#allocation4]
    $region25: #{tpu_custom_call.1} parent=1 // pred_fallthru
      _
    // Predicated region
    $region26: #{tpu_custom_call.1} parent=1 // pred_check
      _
    $region27: #{tpu_custom_call.1} parent=1 // pred_check_branch
      %752 = sbr.rel (0) target = $region29
    $region28: #{tpu_custom_call.1} parent=1 // pred_region
      %753 = dma.done [#allocation4], 16
    $region29: #{tpu_custom_call.1} parent=1 // pred_fallthru
      _
    %754 = vsyncpa [#allocation3], 1
    %755 = vsyncpa [#allocation4], 1

</llo_original>
